<compile_context>
chip_gen: v5e
topology: v5e:2x2
jax: 0.10.0
libtpu: 0.0.40
codegen_flags: <defaults>
</compile_context>

<pallas_src>
import math

import jax
import jax.numpy as jnp
from jax import lax
from jax.experimental import pallas as pl
from jax.experimental.pallas import tpu as pltpu


# ----------------------------- kernel body ---------------------------------


def _sdpa_body(q_ref, k_ref, v_ref, mask_ref, out_ref, score_ref, acc_ref):
    """One (head-group, q-tile, k-tile) grid step.

    q_ref:    (G, TQ, D)        k_ref / v_ref: (G, TK, D)
    mask_ref: (G or 1, TQ, TK) int8, or None
    out_ref:  (G, TQ, D)        score_ref:     (G, TQ, TK) f32
    acc_ref:  (G, TQ, D) f32 scratch, accumulated over the key-tile axis.
    """
    ki = pl.program_id(2)

    @pl.when(ki == 0)
    def _init():
        acc_ref[...] = jnp.zeros_like(acc_ref)

    d_k = q_ref.shape[-1]
    # Fold the 1/sqrt(d_k) scale into q (L*D elements) instead of the L*L score.
    qs = q_ref[...] * (1.0 / math.sqrt(d_k))
    k = k_ref[...]
    v = v_ref[...]

    # (G, TQ, TK): contract D directly on the MXU -- no materialized K^T.
    s = lax.dot_general(
        qs, k,
        dimension_numbers=(((2,), (2,)), ((0,), (0,))),
        preferred_element_type=jnp.float32,
    )

    if mask_ref is not None:
        s = jnp.where(mask_ref[...] == 0, jnp.float32(-10000.0), s)

    score_ref[...] = s.astype(score_ref.dtype)

    # (G, TQ, D): score @ v, accumulated in f32 over key tiles.
    acc_ref[...] += lax.dot_general(
        s.astype(v.dtype), v,
        dimension_numbers=(((2,), (1,)), ((0,), (0,))),
        preferred_element_type=jnp.float32,
    )

    @pl.when(ki == pl.num_programs(2) - 1)
    def _finalize():
        out_ref[...] = acc_ref[...].astype(out_ref.dtype)


def _sdpa_kernel_nomask(q_ref, k_ref, v_ref, out_ref, score_ref, acc_ref):
    _sdpa_body(q_ref, k_ref, v_ref, None, out_ref, score_ref, acc_ref)


def _sdpa_kernel_mask(q_ref, k_ref, v_ref, mask_ref, out_ref, score_ref, acc_ref):
    _sdpa_body(q_ref, k_ref, v_ref, mask_ref, out_ref, score_ref, acc_ref)


# ----------------------------- wrapper --------------------------------------


def _vmem_capacity_bytes():
    try:
        return int(pltpu.get_tpu_info().vmem_capacity_bytes)
    except Exception:
        return 64 * 1024 * 1024  # conservative (v7x-sized) fallback


def _pick_tiles(BH, L, D, itemsize, has_mask, vmem_budget):
    """Choose (group, TQ, TK, nq, nk) so the working set fits the VMEM budget."""
    # Sequence tiling only when L is 128-aligned and big enough to matter;
    # otherwise use a full-length block (allowed: block == full array dim).
    tile = L
    if L > 512 and L % 128 == 0:
        for cand in (512, 384, 256, 128):
            if L % cand == 0:
                tile = cand
                break
    tq = tk = tile
    nq = L // tq
    nk = L // tk

    def est_bytes(g):
        qkv = 2 * (g * tq * D + 2 * g * tk * D) * itemsize     # double-buffered inputs
        outs = 2 * (g * tq * D * itemsize + g * tq * tk * 4)   # out + f32 score blocks
        msk = 2 * g * tq * tk if has_mask else 0               # int8 mask (upper bound)
        acc = g * tq * D * 4                                   # f32 accumulator scratch
        return qkv + outs + msk + acc

    # Group several (batch, head) slices per grid step to amortize the ~0.35us
    # per-step overhead, but keep >= 2 groups so megacore / v7x has parallel work.
    group = 1
    for g in range(1, BH + 1):
        if BH % g != 0 or est_bytes(g) > vmem_budget:
            continue
        if BH // g >= 2 or BH == 1:
            group = g
    return group, tq, tk, nq, nk


def _prepare_mask(mask, B, H, L):
    """Return (mask_flat int8, kind) without materializing a full f32 mask.

    kind == "shared":   mask_flat has shape (1, L, L), reused for every head
                        via the BlockSpec index_map (block index 0).
    kind == "per_head": mask_flat has shape (B*H, L, L).
    """
    m = jnp.asarray(mask)
    while m.ndim < 4:
        m = m[None]
    mb, mh = m.shape[0], m.shape[1]
    if mb == 1 and mh == 1:
        m = (jnp.broadcast_to(m, (1, 1, L, L)) != 0).astype(jnp.int8)
        return m.reshape(1, L, L), "shared"
    # Exact or partially-broadcast per-(batch,head) masks: expand, but keep int8
    # (4x smaller than the previous f32 materialization).
    m = (jnp.broadcast_to(m, (B, H, L, L)) != 0).astype(jnp.int8)
    return m.reshape(B * H, L, L), "per_head"


def scaled_dot_product_attention(q, k, v, mask=None):
    """q, k, v: [B, H, L, d_k]; optional mask broadcastable to [B, H, L, L].

    Returns (out, score): out [B, H, L, d_k], score [B, H, L, L] (float32),
    matching the PyTorch ScaledDotProductAttention.forward semantics
    (no softmax; masked_fill with -10000 where mask == 0).
    """
    B, H, L, D = q.shape
    BH = B * H
    qf = q.reshape(BH, L, D)
    kf = k.reshape(BH, L, D)
    vf = v.reshape(BH, L, D)

    itemsize = jnp.dtype(q.dtype).itemsize
    vmem_cap = _vmem_capacity_bytes()
    G, TQ, TK, nq, nk = _pick_tiles(
        BH, L, D, itemsize, mask is not None, vmem_budget=vmem_cap // 4)

    grid = (BH // G, nq, nk)
    q_spec = pl.BlockSpec((G, TQ, D), lambda g, iq, ik: (g, iq, 0))
    kv_spec = pl.BlockSpec((G, TK, D), lambda g, iq, ik: (g, ik, 0))
    out_spec = pl.BlockSpec((G, TQ, D), lambda g, iq, ik: (g, iq, 0))
    score_spec = pl.BlockSpec((G, TQ, TK), lambda g, iq, ik: (g, iq, ik))

    out_shapes = (
        jax.ShapeDtypeStruct((BH, L, D), q.dtype),
        jax.ShapeDtypeStruct((BH, L, L), jnp.float32),
    )

    mask_bytes = 0
    if mask is None:
        kernel = _sdpa_kernel_nomask
        in_specs = [q_spec, kv_spec, kv_spec]
        operands = (qf, kf, vf)
    else:
        mf, kind = _prepare_mask(mask, B, H, L)
        mask_bytes = mf.size  # int8 -> 1 byte/elem
        if kind == "shared":
            mask_spec = pl.BlockSpec((1, TQ, TK), lambda g, iq, ik: (0, iq, ik))
        else:
            mask_spec = pl.BlockSpec((G, TQ, TK), lambda g, iq, ik: (g, iq, ik))
        kernel = _sdpa_kernel_mask
        in_specs = [q_spec, kv_spec, kv_spec, mask_spec]
        operands = (qf, kf, vf, mf)

    cost = pl.CostEstimate(
        flops=4 * BH * L * L * D,           # q@k^T and score@v
        transcendentals=0,
        bytes_accessed=(4 * BH * L * D * itemsize   # q, k, v, out
                        + BH * L * L * 4            # f32 score writeback
                        + mask_bytes),
    )

    out_f, score_f = pl.pallas_call(
        kernel,
        out_shape=out_shapes,
        grid_spec=pltpu.PrefetchScalarGridSpec(
            num_scalar_prefetch=0,
            grid=grid,
            in_specs=in_specs,
            out_specs=(out_spec, score_spec),
            scratch_shapes=[pltpu.VMEM((G, TQ, D), jnp.float32)],
        ),
        compiler_params=pltpu.CompilerParams(
            dimension_semantics=("parallel", "parallel", "arbitrary"),
            vmem_limit_bytes=min(vmem_cap // 2, 64 * 1024 * 1024),
        ),
        cost_estimate=cost,
    )(*operands)

    return out_f.reshape(B, H, L, D), score_f.reshape(B, H, L, L)


# ----------------------------- reference & test ------------------------------


def _reference(q, k, v, mask=None):
    d_k = k.shape[-1]
    score = jnp.einsum("bhld,bhmd->bhlm", q, k) / math.sqrt(d_k)
    if mask is not None:
        score = jnp.where(mask == 0, -10000.0, score)
    out = jnp.einsum("bhlm,bhmd->bhld", score, v)
    return out, score


if __name__ == "__main__":
    B, H, L, D = 2, 4, 8, 32
    key = jax.random.PRNGKey(0)
    kq, kk, kv, km = jax.random.split(key, 4)
    q = jax.random.normal(kq, (B, H, L, D), dtype=jnp.float32)
    k = jax.random.normal(kk, (B, H, L, D), dtype=jnp.float32)
    v = jax.random.normal(kv, (B, H, L, D), dtype=jnp.float32)
    mask = (jax.random.uniform(km, (B, H, L, L)) > 0.3).astype(jnp.int32)
    mask_shared = mask[:1, :1]  # broadcastable (1, 1, L, L) mask -> "shared" path

    out0, score0 = scaled_dot_product_attention(q, k, v, mask=None)
    out1, score1 = scaled_dot_product_attention(q, k, v, mask=mask)
    out2, score2 = scaled_dot_product_attention(q, k, v, mask=mask_shared)
    jax.block_until_ready((out0, score0, out1, score1, out2, score2))

    ref_out0, ref_score0 = _reference(q, k, v, None)
    ref_out1, ref_score1 = _reference(q, k, v, mask)
    ref_out2, ref_score2 = _reference(q, k, v, mask_shared)

    assert jnp.allclose(out0, ref_out0, atol=1e-3, rtol=1e-4), "out (no mask) mismatch"
    assert jnp.allclose(score0, ref_score0, atol=1e-3, rtol=1e-4), "score (no mask) mismatch"
    assert jnp.allclose(out1, ref_out1, atol=1e-3, rtol=1e-4), "out (mask) mismatch"
    assert jnp.allclose(score1, ref_score1, atol=1e-3, rtol=1e-4), "score (mask) mismatch"
    assert jnp.allclose(out2, ref_out2, atol=1e-3, rtol=1e-4), "out (shared mask) mismatch"
    assert jnp.allclose(score2, ref_score2, atol=1e-3, rtol=1e-4), "score (shared mask) mismatch"

    print("KERNEL_OK")
</pallas_src>

<mosaic_0001>
module attributes {stable_mosaic.version = 11 : i64} {
  func.func @_sdpa_kernel_nomask(%arg0: i32, %arg1: i32, %arg2: i32, %arg3: memref<4x8x32xf32, #tpu.memory_space<vmem>>, %arg4: memref<4x8x32xf32, #tpu.memory_space<vmem>>, %arg5: memref<4x8x32xf32, #tpu.memory_space<vmem>>, %arg6: memref<4x8x32xf32, #tpu.memory_space<vmem>>, %arg7: memref<4x8x8xf32, #tpu.memory_space<vmem>>, %arg8: memref<4x8x32xf32, #tpu.memory_space<vmem>>) attributes {dimension_semantics = [#tpu.dimension_semantics<parallel>, #tpu.dimension_semantics<parallel>, #tpu.dimension_semantics<arbitrary>], iteration_bounds = array<i64: 2, 1, 1>, scalar_prefetch = 0 : i64, scratch_operands = 1 : i64, tpu.core_type = #tpu.core_type<tc>, window_params = [{transform_indices = @transform_0, window_bounds = array<i64: 4, 8, 32>}, {transform_indices = @transform_1, window_bounds = array<i64: 4, 8, 32>}, {transform_indices = @transform_2, window_bounds = array<i64: 4, 8, 32>}, {transform_indices = @transform_3, window_bounds = array<i64: 4, 8, 32>}, {transform_indices = @transform_4, window_bounds = array<i64: 4, 8, 8>}]} {
    %c0_i32 = arith.constant 0 : i32
    %0 = arith.cmpi eq, %arg2, %c0_i32 : i32
    %1 = arith.extui %0 : i1 to i32
    %c0_i32_0 = arith.constant 0 : i32
    %2 = arith.cmpi ne, %1, %c0_i32_0 : i32
    scf.if %2 {
      %cst_22 = arith.constant 0.000000e+00 : f32
      %17 = vector.broadcast %cst_22 : f32 to vector<4x8x32xf32>
      %c0_23 = arith.constant 0 : index
      %c0_24 = arith.constant 0 : index
      %c0_25 = arith.constant 0 : index
      %18 = vector.load %arg8[%c0_23, %c0_24, %c0_25] : memref<4x8x32xf32, #tpu.memory_space<vmem>>, vector<4x8x32xf32>
      tpu.vector_store %arg8[%c0_23, %c0_24, %c0_25], %17 {strides = array<i32>} : memref<4x8x32xf32, #tpu.memory_space<vmem>>, vector<4x8x32xf32>,
    } else {
    }
    %c0 = arith.constant 0 : index
    %c0_1 = arith.constant 0 : index
    %c0_2 = arith.constant 0 : index
    %3 = vector.load %arg3[%c0, %c0_1, %c0_2] : memref<4x8x32xf32, #tpu.memory_space<vmem>>, vector<4x8x32xf32>
    %cst = arith.constant 0.176776692 : f32
    %4 = vector.broadcast %cst : f32 to vector<4x8x32xf32>
    %5 = arith.mulf %3, %4 : vector<4x8x32xf32>
    %c0_3 = arith.constant 0 : index
    %c0_4 = arith.constant 0 : index
    %c0_5 = arith.constant 0 : index
    %6 = vector.load %arg4[%c0_3, %c0_4, %c0_5] : memref<4x8x32xf32, #tpu.memory_space<vmem>>, vector<4x8x32xf32>
    %c0_6 = arith.constant 0 : index
    %c0_7 = arith.constant 0 : index
    %c0_8 = arith.constant 0 : index
    %7 = vector.load %arg5[%c0_6, %c0_7, %c0_8] : memref<4x8x32xf32, #tpu.memory_space<vmem>>, vector<4x8x32xf32>
    %cst_9 = arith.constant dense<0.000000e+00> : vector<4x8x8xf32>
    %8 = tpu.matmul %5, %6, %cst_9 {dimension_numbers = #tpu.dot_dimension_numbers<[2], [2], [1], [1], [0, 0, 0, 1, 1, 1], [0], [0]>} : vector<4x8x32xf32>, vector<4x8x32xf32>, vector<4x8x8xf32> -> vector<4x8x8xf32>
    %c0_10 = arith.constant 0 : index
    %c0_11 = arith.constant 0 : index
    %c0_12 = arith.constant 0 : index
    %9 = vector.load %arg7[%c0_10, %c0_11, %c0_12] : memref<4x8x8xf32, #tpu.memory_space<vmem>>, vector<4x8x8xf32>
    tpu.vector_store %arg7[%c0_10, %c0_11, %c0_12], %8 {strides = array<i32>} : memref<4x8x8xf32, #tpu.memory_space<vmem>>, vector<4x8x8xf32>,
    %c0_13 = arith.constant 0 : index
    %c0_14 = arith.constant 0 : index
    %c0_15 = arith.constant 0 : index
    %10 = vector.load %arg8[%c0_13, %c0_14, %c0_15] : memref<4x8x32xf32, #tpu.memory_space<vmem>>, vector<4x8x32xf32>
    %cst_16 = arith.constant dense<0.000000e+00> : vector<4x8x32xf32>
    %11 = tpu.matmul %8, %7, %cst_16 {dimension_numbers = #tpu.dot_dimension_numbers<[2], [1], [1], [2], [0, 0, 0, 1, 1, 2], [0], [0]>} : vector<4x8x8xf32>, vector<4x8x32xf32>, vector<4x8x32xf32> -> vector<4x8x32xf32>
    %12 = arith.addf %10, %11 : vector<4x8x32xf32>
    %c0_17 = arith.constant 0 : index
    %c0_18 = arith.constant 0 : index
    %c0_19 = arith.constant 0 : index
    %13 = vector.load %arg8[%c0_17, %c0_18, %c0_19] : memref<4x8x32xf32, #tpu.memory_space<vmem>>, vector<4x8x32xf32>
    tpu.vector_store %arg8[%c0_17, %c0_18, %c0_19], %12 {strides = array<i32>} : memref<4x8x32xf32, #tpu.memory_space<vmem>>, vector<4x8x32xf32>,
    %c0_i32_20 = arith.constant 0 : i32
    %14 = arith.cmpi eq, %arg2, %c0_i32_20 : i32
    %15 = arith.extui %14 : i1 to i32
    %c0_i32_21 = arith.constant 0 : i32
    %16 = arith.cmpi ne, %15, %c0_i32_21 : i32
    scf.if %16 {
      %c0_22 = arith.constant 0 : index
      %c0_23 = arith.constant 0 : index
      %c0_24 = arith.constant 0 : index
      %17 = vector.load %arg8[%c0_22, %c0_23, %c0_24] : memref<4x8x32xf32, #tpu.memory_space<vmem>>, vector<4x8x32xf32>
      %c0_25 = arith.constant 0 : index
      %c0_26 = arith.constant 0 : index
      %c0_27 = arith.constant 0 : index
      %18 = vector.load %arg6[%c0_25, %c0_26, %c0_27] : memref<4x8x32xf32, #tpu.memory_space<vmem>>, vector<4x8x32xf32>
      tpu.vector_store %arg6[%c0_25, %c0_26, %c0_27], %17 {strides = array<i32>} : memref<4x8x32xf32, #tpu.memory_space<vmem>>, vector<4x8x32xf32>,
    } else {
    }
    return
  }
  func.func @transform_0(%arg0: i32, %arg1: i32, %arg2: i32) -> (i32, i32, i32) {
    %c0_i32 = arith.constant 0 : i32
    %c0_i32_0 = arith.constant 0 : i32
    return %arg0, %arg1, %c0_i32 : i32, i32, i32
  }
  func.func @transform_1(%arg0: i32, %arg1: i32, %arg2: i32) -> (i32, i32, i32) {
    %c0_i32 = arith.constant 0 : i32
    %c0_i32_0 = arith.constant 0 : i32
    return %arg0, %arg2, %c0_i32 : i32, i32, i32
  }
  func.func @transform_2(%arg0: i32, %arg1: i32, %arg2: i32) -> (i32, i32, i32) {
    %c0_i32 = arith.constant 0 : i32
    %c0_i32_0 = arith.constant 0 : i32
    return %arg0, %arg2, %c0_i32 : i32, i32, i32
  }
  func.func @transform_3(%arg0: i32, %arg1: i32, %arg2: i32) -> (i32, i32, i32) {
    %c0_i32 = arith.constant 0 : i32
    %c0_i32_0 = arith.constant 0 : i32
    return %arg0, %arg1, %c0_i32 : i32, i32, i32
  }
  func.func @transform_4(%arg0: i32, %arg1: i32, %arg2: i32) -> (i32, i32, i32) {
    %c0_i32 = arith.constant 0 : i32
    return %arg0, %arg1, %arg2 : i32, i32, i32
  }
}

</mosaic_0001>

<llo_original>
// kernel: tpu_custom_call.1
$region0: #{tpu_custom_call.1}
  #allocation0 [shape = 'u32[]', space=smem, size = 0x4, offset = 0x4, fixed_abs, tag = 'smem constant byte address 0x4 - core index']
  #allocation1 [shape = 'u32[72,128]{1,0:T(1,128)}', space=vmem, size = 0x9000, scoped, tag = 'internal scratch']
  #allocation2 [shape = 'f32[4,8,32]{2,1,0:T(8,128)}', space=vmem, size = 0x4000, scoped, tag = 'scratch operand']
  %s0 = inlined_call_operand.hbm [shape: f32[8,8,32], index: 0, kind: input, shape index: {}]
  %s1 = inlined_call_operand.hbm [shape: f32[8,8,32], index: 1, kind: input, shape index: {}]
  %s2 = inlined_call_operand.hbm [shape: f32[8,8,32], index: 2, kind: input, shape index: {}]
  %s3 = inlined_call_operand.hbm [shape: f32[8,8,32], index: 3, kind: output, shape index: {0}]
  %s4 = inlined_call_operand.hbm [shape: f32[8,8,8], index: 4, kind: output, shape index: {1}]
  %5 = xla_tuple %s3, %s4
  %s6 = sld [smem:[#allocation0]]
  $region73: #{tpu_custom_call.1} parent=0
    _
  %s8 = ssub.s32 1, %s6
  %s9 = scalar_select 0, %s8, %s6
  $region1: #{tpu_custom_call.1} parent=0
    #allocation3 [shape = 'u8[32768]{0}', space=vmem, size = 0x8000, scoped, tag = 'input window, operand 0']
    #allocation4 [shape = 's32[2]{0}', space=sflag, size = 0x8, scoped, tag = 'scoped memory for tpu_custom_call.1']
    #allocation5 [shape = 's32[2]{0}', space=sflag, size = 0x8, scoped, tag = 'scoped memory for tpu_custom_call.1']
    #allocation6 [shape = 'u8[32768]{0}', space=vmem, size = 0x8000, scoped, tag = 'input window, operand 1']
    #allocation7 [shape = 's32[2]{0}', space=sflag, size = 0x8, scoped, tag = 'scoped memory for tpu_custom_call.1']
    #allocation8 [shape = 'u8[32768]{0}', space=vmem, size = 0x8000, scoped, tag = 'input window, operand 2']
    #allocation9 [shape = 'u8[32768]{0}', space=vmem, size = 0x8000, scoped, tag = 'output window, operand 0']
    #allocation10 [shape = 'u8[32768]{0}', space=vmem, size = 0x8000, scoped, tag = 'output window, operand 1']
    #allocation11 [shape = 's32[2]{0}', space=sflag, size = 0x8, scoped, tag = 'scoped memory for tpu_custom_call.1']
    %10 = vsyncpa [#allocation4], 0
    %s11 = scalar_lea.sflag [#allocation4], 1
    %12 = vsyncpa %s11, 0
    %13 = vsyncpa [#allocation7], 0
    %s14 = scalar_lea.sflag [#allocation7], 1
    %15 = vsyncpa %s14, 0
    %16 = vsyncpa [#allocation5], 0
    %s17 = scalar_lea.sflag [#allocation5], 1
    %18 = vsyncpa %s17, 0
    %19 = vsyncpa [#allocation11], 0
    %s20 = scalar_lea.sflag [#allocation11], 1
    %21 = vsyncpa %s20, 0
    loop: start=0, step=1, limit=4
    $region2: #{tpu_custom_call.1} parent=1 // loop_pre_header
      _
    $region3: #{tpu_custom_call.1} parent=1 // loop_header
      %s23 = sphi 0, %s27
      %p24 = scmp.ge.s32.totalorder %s23, 4
      %s30 = sphi 0, %s49
      %s31 = sphi 0, %s45
      %s32 = sphi 0, %s41
      %s33 = sphi 0, %s30
      %s34 = sphi 0, %s31
      %s35 = sphi 0, %s32
      %s36 = sphi 0, %s33
      %s37 = sphi 0, %s34
      %s38 = sphi 0, %s35
      %s54 = sphi 0, %s56
      %s57 = sphi 0, %s54
      %s58 = sphi 0, %s57
      %s74 = sphi 0, %s58
      %s82 = sphi 0, %s84
      %s85 = sphi 0, %s82
      %s86 = sphi 0, %s85
      %s102 = sphi 0, %s86
      %s110 = sphi 0, %s112
      %s113 = sphi 0, %s110
      %s114 = sphi 0, %s113
      %s130 = sphi 0, %s114
      %s138 = sphi 0, %s140
      %s141 = sphi 0, %s138
      %s142 = sphi 0, %s141
      %s158 = sphi 0, %s142
      %s168 = sphi 0, %s170
      %s171 = sphi 0, %s168
      %s172 = sphi 0, %s171
      %s188 = sphi 0, %s172
    $region4: #{tpu_custom_call.1} parent=1 // loop_header_branch
      %26 = sbr.rel (%p24) target = $region8
    $region5: #{tpu_custom_call.1} parent=1 // loop_body
      %s28 = ssub.s32 %s23, 1
      %s29 = ssub.s32 %s23, 2
      %s39 = sadd.s32 1, %s32
      %p40 = scmp.ge.s32.totalorder %s39, 1
      %s41 = scalar_select %p40, 0, %s39
      %s42 = sadd.s32 1, %s31
      %s43 = scalar_select %p40, %s42, %s31
      %p44 = scmp.ge.s32.totalorder %s43, 1
      %s45 = scalar_select %p44, 0, %s43
      %s46 = sadd.s32 1, %s30
      %s47 = scalar_select %p44, %s46, %s30
      %p48 = scmp.ge.s32.totalorder %s47, 2
      %s49 = scalar_select %p48, 0, %s47
      %s50 = ssub.s32 %s30, %s49
      %s51 = ssub.s32 %s31, %s45
      %s52 = sor.u32 %s50, %s51
      %p53 = scmp.eq.s32.totalorder %s52, 0
      %s55 = sadd.s32 %s54, 1
      %s56 = scalar_select %p53, %s54, %s55
      %p59 = pneg %p53
      %p60 = scmp.eq.s32.totalorder %s23, 1
      %p61 = por %p59, %p60
      %p62 = scmp.ne.s32.totalorder %s54, %s57
      %p63 = scmp.eq.s32.totalorder %s23, 0
      %p64 = por %p62, %p63
      %p65 = scmp.ne.s32.totalorder %s54, %s57
      %p66 = scmp.eq.s32.totalorder %s28, 1
      %p67 = por %p65, %p66
      %p68 = scmp.ne.s32.totalorder %s57, %s58
      %p69 = scmp.eq.s32.totalorder %s28, 0
      %p70 = por %p68, %p69
      %p71 = scmp.ne.s32.totalorder %s57, %s58
      %p72 = scmp.eq.s32.totalorder %s29, 1
      %p73 = por %p71, %p72
      %p75 = scmp.ne.s32.totalorder %s58, %s74
      %p76 = scmp.eq.s32.totalorder %s29, 0
      %p77 = por %p75, %p76
      %s78 = ssub.s32 %s30, %s49
      %s79 = ssub.s32 %s32, %s41
      %s80 = sor.u32 %s78, %s79
      %p81 = scmp.eq.s32.totalorder %s80, 0
      %s83 = sadd.s32 %s82, 1
      %s84 = scalar_select %p81, %s82, %s83
      %p87 = pneg %p81
      %p88 = scmp.eq.s32.totalorder %s23, 1
      %p89 = por %p87, %p88
      %p90 = scmp.ne.s32.totalorder %s82, %s85
      %p91 = scmp.eq.s32.totalorder %s23, 0
      %p92 = por %p90, %p91
      %p93 = scmp.ne.s32.totalorder %s82, %s85
      %p94 = scmp.eq.s32.totalorder %s28, 1
      %p95 = por %p93, %p94
      %p96 = scmp.ne.s32.totalorder %s85, %s86
      %p97 = scmp.eq.s32.totalorder %s28, 0
      %p98 = por %p96, %p97
      %p99 = scmp.ne.s32.totalorder %s85, %s86
      %p100 = scmp.eq.s32.totalorder %s29, 1
      %p101 = por %p99, %p100
      %p103 = scmp.ne.s32.totalorder %s86, %s102
      %p104 = scmp.eq.s32.totalorder %s29, 0
      %p105 = por %p103, %p104
      %s106 = ssub.s32 %s30, %s49
      %s107 = ssub.s32 %s32, %s41
      %s108 = sor.u32 %s106, %s107
      %p109 = scmp.eq.s32.totalorder %s108, 0
      %s111 = sadd.s32 %s110, 1
      %s112 = scalar_select %p109, %s110, %s111
      %p115 = pneg %p109
      %p116 = scmp.eq.s32.totalorder %s23, 1
      %p117 = por %p115, %p116
      %p118 = scmp.ne.s32.totalorder %s110, %s113
      %p119 = scmp.eq.s32.totalorder %s23, 0
      %p120 = por %p118, %p119
      %p121 = scmp.ne.s32.totalorder %s110, %s113
      %p122 = scmp.eq.s32.totalorder %s28, 1
      %p123 = por %p121, %p122
      %p124 = scmp.ne.s32.totalorder %s113, %s114
      %p125 = scmp.eq.s32.totalorder %s28, 0
      %p126 = por %p124, %p125
      %p127 = scmp.ne.s32.totalorder %s113, %s114
      %p128 = scmp.eq.s32.totalorder %s29, 1
      %p129 = por %p127, %p128
      %p131 = scmp.ne.s32.totalorder %s114, %s130
      %p132 = scmp.eq.s32.totalorder %s29, 0
      %p133 = por %p131, %p132
      %s134 = ssub.s32 %s30, %s49
      %s135 = ssub.s32 %s31, %s45
      %s136 = sor.u32 %s134, %s135
      %p137 = scmp.eq.s32.totalorder %s136, 0
      %s139 = sadd.s32 %s138, 1
      %s140 = scalar_select %p137, %s138, %s139
      %p143 = pneg %p137
      %p144 = scmp.eq.s32.totalorder %s23, 1
      %p145 = por %p143, %p144
      %p146 = scmp.ne.s32.totalorder %s138, %s141
      %p147 = scmp.eq.s32.totalorder %s23, 0
      %p148 = por %p146, %p147
      %p149 = scmp.ne.s32.totalorder %s138, %s141
      %p150 = scmp.eq.s32.totalorder %s28, 1
      %p151 = por %p149, %p150
      %p152 = scmp.ne.s32.totalorder %s141, %s142
      %p153 = scmp.eq.s32.totalorder %s28, 0
      %p154 = por %p152, %p153
      %p155 = scmp.ne.s32.totalorder %s141, %s142
      %p156 = scmp.eq.s32.totalorder %s29, 1
      %p157 = por %p155, %p156
      %p159 = scmp.ne.s32.totalorder %s142, %s158
      %p160 = scmp.eq.s32.totalorder %s29, 0
      %p161 = por %p159, %p160
      %s162 = ssub.s32 %s30, %s49
      %s163 = ssub.s32 %s31, %s45
      %s164 = sor.u32 %s162, %s163
      %s165 = ssub.s32 %s32, %s41
      %s166 = sor.u32 %s164, %s165
      %p167 = scmp.eq.s32.totalorder %s166, 0
      %s169 = sadd.s32 %s168, 1
      %s170 = scalar_select %p167, %s168, %s169
      %p173 = pneg %p167
      %p174 = scmp.eq.s32.totalorder %s23, 1
      %p175 = por %p173, %p174
      %p176 = scmp.ne.s32.totalorder %s168, %s171
      %p177 = scmp.eq.s32.totalorder %s23, 0
      %p178 = por %p176, %p177
      %p179 = scmp.ne.s32.totalorder %s168, %s171
      %p180 = scmp.eq.s32.totalorder %s28, 1
      %p181 = por %p179, %p180
      %p182 = scmp.ne.s32.totalorder %s171, %s172
      %p183 = scmp.eq.s32.totalorder %s28, 0
      %p184 = por %p182, %p183
      %p185 = scmp.ne.s32.totalorder %s171, %s172
      %p186 = scmp.eq.s32.totalorder %s29, 1
      %p187 = por %p185, %p186
      %p189 = scmp.ne.s32.totalorder %s172, %s188
      %p190 = scmp.eq.s32.totalorder %s29, 0
      %p191 = por %p189, %p190
      %p192 = scmp.le.s32.totalorder 1, %s23
      %p193 = scmp.lt.s32.totalorder %s23, 3
      %p194 = pnand %p192, %p193
      %p195 = pneg %p194
      // Predicated region
      $region9: #{tpu_custom_call.1} parent=5 // pred_check
        _
      $region10: #{tpu_custom_call.1} parent=5 // pred_check_branch
        %197 = sbr.rel (%p194) target = $region12
      $region11: #{tpu_custom_call.1} parent=5 // pred_region
        %s198 = ssub.s32 %s23, 1
      $region12: #{tpu_custom_call.1} parent=5 // pred_fallthru
        _
      %p199 = scmp.lt.s32.totalorder %s23, 2
      // Predicated region
      $region13: #{tpu_custom_call.1} parent=5 // pred_check
        %p200 = pneg %p199
      $region14: #{tpu_custom_call.1} parent=5 // pred_check_branch
        %202 = sbr.rel (%p200) target = $region16
      $region15: #{tpu_custom_call.1} parent=5 // pred_region
        // Predicated region
        $region17: #{tpu_custom_call.1} parent=15 // pred_check
          %p203 = pneg %p64
        $region18: #{tpu_custom_call.1} parent=15 // pred_check_branch
          %205 = sbr.rel (%p203) target = $region20
        $region19: #{tpu_custom_call.1} parent=15 // pred_region
          %s206 = sand.u32 %s54, 1
          %s207 = scalar_lea.sflag [#allocation4], %s206
          %s208 = sand.u32 %s54, 1
          %s209 = smul.addr %s208, 32
          %s210 = scalar_lea.vmem [#allocation3], %s209
          %s211 = smul.u32 4, %s30
          %213 = vsyncadd %s207, 0
          %s214 = sadd.s32 %s31, %s211
          %s215 = smul.addr %s214, 8
          %s216 = scalar_lea.hbm %s0, %s215
          %s217 = sshll.u32 %s216, 4
          %s218 = int_to_ptr.hbm [resolvable:$true] %s217
          %s219 = sshll.u32 %s210, 4
          %s220 = int_to_ptr.vmem [resolvable:$true] %s219
          %225 = dma.hbm_to_vmem [thread:$0]  %s218, 512, %s220, %s207, 128, 128, 8
        $region20: #{tpu_custom_call.1} parent=15 // pred_fallthru
          _
        // Predicated region
        $region21: #{tpu_custom_call.1} parent=15 // pred_check
          %p226 = pneg %p92
        $region22: #{tpu_custom_call.1} parent=15 // pred_check_branch
          %228 = sbr.rel (%p226) target = $region24
        $region23: #{tpu_custom_call.1} parent=15 // pred_region
          %s229 = sand.u32 %s23, 1
          %s230 = scalar_lea.sflag [#allocation7], %s229
          %s231 = sand.u32 %s82, 1
          %s232 = smul.addr %s231, 32
          %s233 = scalar_lea.vmem [#allocation6], %s232
          %s234 = smul.u32 4, %s30
          %236 = vsyncadd %s230, 0
          %s237 = sadd.s32 %s32, %s234
          %s238 = smul.addr %s237, 8
          %s239 = scalar_lea.hbm %s1, %s238
          %s240 = sshll.u32 %s239, 4
          %s241 = int_to_ptr.hbm [resolvable:$true] %s240
          %s242 = sshll.u32 %s233, 4
          %s243 = int_to_ptr.vmem [resolvable:$true] %s242
          %248 = dma.hbm_to_vmem [thread:$0]  %s241, 512, %s243, %s230, 128, 128, 8
        $region24: #{tpu_custom_call.1} parent=15 // pred_fallthru
          _
        // Predicated region
        $region25: #{tpu_custom_call.1} parent=15 // pred_check
          %p249 = pneg %p120
        $region26: #{tpu_custom_call.1} parent=15 // pred_check_branch
          %251 = sbr.rel (%p249) target = $region28
        $region27: #{tpu_custom_call.1} parent=15 // pred_region
          %s252 = sand.u32 %s23, 1
          %s253 = scalar_lea.sflag [#allocation7], %s252
          %s254 = sand.u32 %s110, 1
          %s255 = smul.addr %s254, 32
          %s256 = scalar_lea.vmem [#allocation8], %s255
          %s257 = smul.u32 4, %s30
          %259 = vsyncadd %s253, 0
          %s260 = sadd.s32 %s32, %s257
          %s261 = smul.addr %s260, 8
          %s262 = scalar_lea.hbm %s2, %s261
          %s263 = sshll.u32 %s262, 4
          %s264 = int_to_ptr.hbm [resolvable:$true] %s263
          %s265 = sshll.u32 %s256, 4
          %s266 = int_to_ptr.vmem [resolvable:$true] %s265
          %271 = dma.hbm_to_vmem [thread:$0]  %s264, 512, %s266, %s253, 128, 128, 8
        $region28: #{tpu_custom_call.1} parent=15 // pred_fallthru
          _
      $region16: #{tpu_custom_call.1} parent=5 // pred_fallthru
        _
      %p272 = scmp.le.s32.totalorder 1, %s23
      %p273 = scmp.lt.s32.totalorder %s23, 3
      %p274 = pnand %p272, %p273
      %p275 = pneg %p274
      // Predicated region
      $region29: #{tpu_custom_call.1} parent=5 // pred_check
        _
      $region30: #{tpu_custom_call.1} parent=5 // pred_check_branch
        %277 = sbr.rel (%p274) target = $region32
      $region31: #{tpu_custom_call.1} parent=5 // pred_region
        %s278 = ssub.s32 %s23, 1
        %s279 = sand.u32 %s57, 1
        %s280 = scalar_lea.sflag [#allocation4], %s279
        %s281 = sand.u32 %s57, 1
        %s282 = smul.addr %s281, 32
        %s283 = scalar_lea.vmem [#allocation3], %s282
        // Predicated region
        $region33: #{tpu_custom_call.1} parent=31 // pred_check
          %p284 = pneg %p70
        $region34: #{tpu_custom_call.1} parent=31 // pred_check_branch
          %286 = sbr.rel (%p284) target = $region36
        $region35: #{tpu_custom_call.1} parent=31 // pred_region
          %288 = dma.done %s280, 512
        $region36: #{tpu_custom_call.1} parent=31 // pred_fallthru
          _
        %s289 = sand.u32 %s28, 1
        %s290 = scalar_lea.sflag [#allocation7], %s289
        %s291 = sand.u32 %s85, 1
        %s292 = smul.addr %s291, 32
        %s293 = scalar_lea.vmem [#allocation6], %s292
        // Predicated region
        $region37: #{tpu_custom_call.1} parent=31 // pred_check
          %p294 = pneg %p98
        $region38: #{tpu_custom_call.1} parent=31 // pred_check_branch
          %296 = sbr.rel (%p294) target = $region40
        $region39: #{tpu_custom_call.1} parent=31 // pred_region
          %298 = dma.done %s290, 512
        $region40: #{tpu_custom_call.1} parent=31 // pred_fallthru
          _
        %s299 = sand.u32 %s28, 1
        %s300 = scalar_lea.sflag [#allocation7], %s299
        %s301 = sand.u32 %s113, 1
        %s302 = smul.addr %s301, 32
        %s303 = scalar_lea.vmem [#allocation8], %s302
        // Predicated region
        $region41: #{tpu_custom_call.1} parent=31 // pred_check
          %p304 = pneg %p126
        $region42: #{tpu_custom_call.1} parent=31 // pred_check_branch
          %306 = sbr.rel (%p304) target = $region44
        $region43: #{tpu_custom_call.1} parent=31 // pred_region
          %308 = dma.done %s300, 512
        $region44: #{tpu_custom_call.1} parent=31 // pred_fallthru
          _
        %s309 = sand.u32 %s57, 1
        %s310 = scalar_lea.sflag [#allocation4], %s309
        %s311 = sand.u32 %s57, 1
        %s312 = smul.addr %s311, 32
        %s313 = scalar_lea.vmem [#allocation3], %s312
        %p314 = pneg %p70
        %p315 = pneg %p67
        %s316 = sand.u32 %s28, 1
        %s317 = scalar_lea.sflag [#allocation7], %s316
        %s318 = sand.u32 %s85, 1
        %s319 = smul.addr %s318, 32
        %s320 = scalar_lea.vmem [#allocation6], %s319
        %p321 = pneg %p98
        %p322 = pneg %p95
        %s323 = sand.u32 %s28, 1
        %s324 = scalar_lea.sflag [#allocation7], %s323
        %s325 = sand.u32 %s113, 1
        %s326 = smul.addr %s325, 32
        %s327 = scalar_lea.vmem [#allocation8], %s326
        %p328 = pneg %p126
        %p329 = pneg %p123
        %p330 = pneg %p154
        %p331 = pneg %p151
        %s332 = sand.u32 %s141, 1
        %s333 = scalar_lea.sflag [#allocation5], %s332
        %s334 = sand.u32 %s141, 1
        %s335 = smul.addr %s334, 32
        %s336 = scalar_lea.vmem [#allocation9], %s335
        %p337 = pneg %p184
        %p338 = pneg %p181
        %s339 = sand.u32 %s171, 1
        %s340 = scalar_lea.sflag [#allocation11], %s339
        %s341 = sand.u32 %s171, 1
        %s342 = smul.addr %s341, 32
        %s343 = scalar_lea.vmem [#allocation10], %s342
        %s344 = smul.u32 4, %s33
        %s345 = smul.u32 4, %s33
        %s346 = smul.u32 4, %s33
        %s347 = smul.u32 4, %s33
        %s348 = smul.u32 4, %s33
        %p349 = scmp.eq.s32.totalorder %s35, 0
        // Predicated region
        $region45: #{tpu_custom_call.1} parent=31 // pred_check
          %p350 = pneg %p349
        $region46: #{tpu_custom_call.1} parent=31 // pred_check_branch
          %352 = sbr.rel (%p350) target = $region48
        $region47: #{tpu_custom_call.1} parent=31 // pred_region
          %vm353 = vcmask 261120
          %354 = vst.msk [vmem:[#allocation2] sm:$0xff] %vm353, 0.0
          %355 = vst.msk [vmem:[#allocation2 + $0x8] sm:$0xff] %vm353, 0.0
          %356 = vst.msk [vmem:[#allocation2 + $0x10] sm:$0xff] %vm353, 0.0
          %357 = vst.msk [vmem:[#allocation2 + $0x18] sm:$0xff] %vm353, 0.0
        $region48: #{tpu_custom_call.1} parent=31 // pred_fallthru
          _
        %v358 = vld [vmem:[%s283] sm:$0xff]
        %v359 = vld [vmem:[%s283 + $0x8] sm:$0xff]
        %v360 = vld [vmem:[%s283 + $0x10] sm:$0xff]
        %v361 = vld [vmem:[%s283 + $0x18] sm:$0xff]
        %v362 = vmul.f32 %v358, 0.17677669
        %v363 = vmul.f32 %v359, 0.17677669
        %v364 = vmul.f32 %v360, 0.17677669
        %v365 = vmul.f32 %v361, 0.17677669
        %v366 = vld [vmem:[%s293] sm:$0xff]
        %v367 = vld [vmem:[%s293 + $0x8] sm:$0xff]
        %v368 = vld [vmem:[%s293 + $0x10] sm:$0xff]
        %v369 = vld [vmem:[%s293 + $0x18] sm:$0xff]
        %v370 = vld [vmem:[%s303] sm:$0xff]
        %v371 = vld [vmem:[%s303 + $0x8] sm:$0xff]
        %v372 = vld [vmem:[%s303 + $0x10] sm:$0xff]
        %v373 = vld [vmem:[%s303 + $0x18] sm:$0xff]
        %vm374 = vcmask 261120
        %v376 = vsel %vm374, %v362, 0
        %v379 = vsel %vm374, %v366, 0
        %381 = vmatpush.xpose.msra.mxu0 0.0
        %382 = vmatpush.xpose.msra.mxu0 0.0
        %383 = vmatpush.xpose.msra.mxu0 0.0
        %384 = vmatpush.xpose.msra.mxu0 0.0
        %385 = vmatpush.xpose.msra.mxu0 0.0
        %386 = vmatpush.xpose.msra.mxu0 0.0
        %387 = vmatpush.xpose.msra.mxu0 0.0
        %388 = vmatpush.xpose.msra.mxu0 0.0
        %389 = vmatpush.xpose.msra.mxu0 0.0
        %390 = vmatpush.xpose.msra.mxu0 0.0
        %391 = vmatpush.xpose.msra.mxu0 0.0
        %392 = vmatpush.xpose.msra.mxu0 0.0
        %393 = vmatpush.xpose.msra.mxu0 0.0
        %394 = vmatpush.xpose.msra.mxu0 0.0
        %395 = vmatpush.xpose.msra.mxu0 0.0
        %396 = vmatpush.xpose.msra.mxu0 %v379
        %397 = vmatmul.f32.gmra.mxu0 %v376
        %v398 = vpop.f32.mrf.mxu0
        %v399 = vadd.f32 0.0, %v398
        %400 = vdwg.mxu0
        %v402 = vsel %vm374, %v363, 0
        %v405 = vsel %vm374, %v367, 0
        %407 = vmatpush.xpose.msra.mxu0 0.0
        %408 = vmatpush.xpose.msra.mxu0 0.0
        %409 = vmatpush.xpose.msra.mxu0 0.0
        %410 = vmatpush.xpose.msra.mxu0 0.0
        %411 = vmatpush.xpose.msra.mxu0 0.0
        %412 = vmatpush.xpose.msra.mxu0 0.0
        %413 = vmatpush.xpose.msra.mxu0 0.0
        %414 = vmatpush.xpose.msra.mxu0 0.0
        %415 = vmatpush.xpose.msra.mxu0 0.0
        %416 = vmatpush.xpose.msra.mxu0 0.0
        %417 = vmatpush.xpose.msra.mxu0 0.0
        %418 = vmatpush.xpose.msra.mxu0 0.0
        %419 = vmatpush.xpose.msra.mxu0 0.0
        %420 = vmatpush.xpose.msra.mxu0 0.0
        %421 = vmatpush.xpose.msra.mxu0 0.0
        %422 = vmatpush.xpose.msra.mxu0 %v405
        %423 = vmatmul.f32.gmra.mxu0 %v402
        %v424 = vpop.f32.mrf.mxu0
        %v425 = vadd.f32 0.0, %v424
        %426 = vdwg.mxu0
        %v428 = vsel %vm374, %v364, 0
        %v431 = vsel %vm374, %v368, 0
        %433 = vmatpush.xpose.msra.mxu0 0.0
        %434 = vmatpush.xpose.msra.mxu0 0.0
        %435 = vmatpush.xpose.msra.mxu0 0.0
        %436 = vmatpush.xpose.msra.mxu0 0.0
        %437 = vmatpush.xpose.msra.mxu0 0.0
        %438 = vmatpush.xpose.msra.mxu0 0.0
        %439 = vmatpush.xpose.msra.mxu0 0.0
        %440 = vmatpush.xpose.msra.mxu0 0.0
        %441 = vmatpush.xpose.msra.mxu0 0.0
        %442 = vmatpush.xpose.msra.mxu0 0.0
        %443 = vmatpush.xpose.msra.mxu0 0.0
        %444 = vmatpush.xpose.msra.mxu0 0.0
        %445 = vmatpush.xpose.msra.mxu0 0.0
        %446 = vmatpush.xpose.msra.mxu0 0.0
        %447 = vmatpush.xpose.msra.mxu0 0.0
        %448 = vmatpush.xpose.msra.mxu0 %v431
        %449 = vmatmul.f32.gmra.mxu0 %v428
        %v450 = vpop.f32.mrf.mxu0
        %v451 = vadd.f32 0.0, %v450
        %452 = vdwg.mxu0
        %v454 = vsel %vm374, %v365, 0
        %v457 = vsel %vm374, %v369, 0
        %459 = vmatpush.xpose.msra.mxu0 0.0
        %460 = vmatpush.xpose.msra.mxu0 0.0
        %461 = vmatpush.xpose.msra.mxu0 0.0
        %462 = vmatpush.xpose.msra.mxu0 0.0
        %463 = vmatpush.xpose.msra.mxu0 0.0
        %464 = vmatpush.xpose.msra.mxu0 0.0
        %465 = vmatpush.xpose.msra.mxu0 0.0
        %466 = vmatpush.xpose.msra.mxu0 0.0
        %467 = vmatpush.xpose.msra.mxu0 0.0
        %468 = vmatpush.xpose.msra.mxu0 0.0
        %469 = vmatpush.xpose.msra.mxu0 0.0
        %470 = vmatpush.xpose.msra.mxu0 0.0
        %471 = vmatpush.xpose.msra.mxu0 0.0
        %472 = vmatpush.xpose.msra.mxu0 0.0
        %473 = vmatpush.xpose.msra.mxu0 0.0
        %474 = vmatpush.xpose.msra.mxu0 %v457
        %475 = vmatmul.f32.gmra.mxu0 %v454
        %v476 = vpop.f32.mrf.mxu0
        %v477 = vadd.f32 0.0, %v476
        %478 = vdwg.mxu0
        %vm479 = vcmask 64512
        %480 = vst.msk [vmem:[%s343] sm:$0xff] %vm479, %v399
        %481 = vst.msk [vmem:[%s343 + $0x8] sm:$0xff] %vm479, %v425
        %482 = vst.msk [vmem:[%s343 + $0x10] sm:$0xff] %vm479, %v451
        %483 = vst.msk [vmem:[%s343 + $0x18] sm:$0xff] %vm479, %v477
        %v484 = vld [vmem:[#allocation2] sm:$0xff]
        %v485 = vld [vmem:[#allocation2 + $0x8] sm:$0xff]
        %v486 = vld [vmem:[#allocation2 + $0x10] sm:$0xff]
        %v487 = vld [vmem:[#allocation2 + $0x18] sm:$0xff]
        %v489 = vsel %vm479, %v399, 0
        %491 = vmatpush.msra.mxu0 0.0
        %492 = vmatpush.msra.mxu0 0.0
        %493 = vmatpush.msra.mxu0 0.0
        %494 = vmatpush.msra.mxu0 0.0
        %495 = vmatpush.msra.mxu0 0.0
        %496 = vmatpush.msra.mxu0 0.0
        %497 = vmatpush.msra.mxu0 0.0
        %498 = vmatpush.msra.mxu0 0.0
        %499 = vmatpush.msra.mxu0 0.0
        %500 = vmatpush.msra.mxu0 0.0
        %501 = vmatpush.msra.mxu0 0.0
        %502 = vmatpush.msra.mxu0 0.0
        %503 = vmatpush.msra.mxu0 0.0
        %504 = vmatpush.msra.mxu0 0.0
        %505 = vmatpush.msra.mxu0 0.0
        %506 = vmatpush.msra.mxu0 %v370
        %507 = vmatmul.f32.gmra.mxu0 %v489
        %v508 = vpop.f32.mrf.mxu0
        %v509 = vadd.f32 0.0, %v508
        %510 = vdwg.mxu0
        %v512 = vsel %vm479, %v425, 0
        %514 = vmatpush.msra.mxu0 0.0
        %515 = vmatpush.msra.mxu0 0.0
        %516 = vmatpush.msra.mxu0 0.0
        %517 = vmatpush.msra.mxu0 0.0
        %518 = vmatpush.msra.mxu0 0.0
        %519 = vmatpush.msra.mxu0 0.0
        %520 = vmatpush.msra.mxu0 0.0
        %521 = vmatpush.msra.mxu0 0.0
        %522 = vmatpush.msra.mxu0 0.0
        %523 = vmatpush.msra.mxu0 0.0
        %524 = vmatpush.msra.mxu0 0.0
        %525 = vmatpush.msra.mxu0 0.0
        %526 = vmatpush.msra.mxu0 0.0
        %527 = vmatpush.msra.mxu0 0.0
        %528 = vmatpush.msra.mxu0 0.0
        %529 = vmatpush.msra.mxu0 %v371
        %530 = vmatmul.f32.gmra.mxu0 %v512
        %v531 = vpop.f32.mrf.mxu0
        %v532 = vadd.f32 0.0, %v531
        %533 = vdwg.mxu0
        %v535 = vsel %vm479, %v451, 0
        %537 = vmatpush.msra.mxu0 0.0
        %538 = vmatpush.msra.mxu0 0.0
        %539 = vmatpush.msra.mxu0 0.0
        %540 = vmatpush.msra.mxu0 0.0
        %541 = vmatpush.msra.mxu0 0.0
        %542 = vmatpush.msra.mxu0 0.0
        %543 = vmatpush.msra.mxu0 0.0
        %544 = vmatpush.msra.mxu0 0.0
        %545 = vmatpush.msra.mxu0 0.0
        %546 = vmatpush.msra.mxu0 0.0
        %547 = vmatpush.msra.mxu0 0.0
        %548 = vmatpush.msra.mxu0 0.0
        %549 = vmatpush.msra.mxu0 0.0
        %550 = vmatpush.msra.mxu0 0.0
        %551 = vmatpush.msra.mxu0 0.0
        %552 = vmatpush.msra.mxu0 %v372
        %553 = vmatmul.f32.gmra.mxu0 %v535
        %v554 = vpop.f32.mrf.mxu0
        %v555 = vadd.f32 0.0, %v554
        %556 = vdwg.mxu0
        %v558 = vsel %vm479, %v477, 0
        %560 = vmatpush.msra.mxu0 0.0
        %561 = vmatpush.msra.mxu0 0.0
        %562 = vmatpush.msra.mxu0 0.0
        %563 = vmatpush.msra.mxu0 0.0
        %564 = vmatpush.msra.mxu0 0.0
        %565 = vmatpush.msra.mxu0 0.0
        %566 = vmatpush.msra.mxu0 0.0
        %567 = vmatpush.msra.mxu0 0.0
        %568 = vmatpush.msra.mxu0 0.0
        %569 = vmatpush.msra.mxu0 0.0
        %570 = vmatpush.msra.mxu0 0.0
        %571 = vmatpush.msra.mxu0 0.0
        %572 = vmatpush.msra.mxu0 0.0
        %573 = vmatpush.msra.mxu0 0.0
        %574 = vmatpush.msra.mxu0 0.0
        %575 = vmatpush.msra.mxu0 %v373
        %576 = vmatmul.f32.gmra.mxu0 %v558
        %v577 = vpop.f32.mrf.mxu0
        %v578 = vadd.f32 0.0, %v577
        %579 = vdwg.mxu0
        %v580 = vadd.f32 %v484, %v509
        %v581 = vadd.f32 %v485, %v532
        %v582 = vadd.f32 %v486, %v555
        %v583 = vadd.f32 %v487, %v578
        %584 = vst.msk [vmem:[#allocation2] sm:$0xff] %vm374, %v580
        %585 = vst.msk [vmem:[#allocation2 + $0x8] sm:$0xff] %vm374, %v581
        %586 = vst.msk [vmem:[#allocation2 + $0x10] sm:$0xff] %vm374, %v582
        %587 = vst.msk [vmem:[#allocation2 + $0x18] sm:$0xff] %vm374, %v583
        // Predicated region
        $region49: #{tpu_custom_call.1} parent=31 // pred_check
          %p588 = pneg %p349
        $region50: #{tpu_custom_call.1} parent=31 // pred_check_branch
          %590 = sbr.rel (%p588) target = $region52
        $region51: #{tpu_custom_call.1} parent=31 // pred_region
          %v591 = vld [vmem:[#allocation2] sm:$0xff]
          %v592 = vld [vmem:[#allocation2 + $0x8] sm:$0xff]
          %v593 = vld [vmem:[#allocation2 + $0x10] sm:$0xff]
          %v594 = vld [vmem:[#allocation2 + $0x18] sm:$0xff]
          %595 = vst.msk [vmem:[%s336] sm:$0xff] %vm374, %v591
          %596 = vst.msk [vmem:[%s336 + $0x8] sm:$0xff] %vm374, %v592
          %597 = vst.msk [vmem:[%s336 + $0x10] sm:$0xff] %vm374, %v593
          %598 = vst.msk [vmem:[%s336 + $0x18] sm:$0xff] %vm374, %v594
        $region52: #{tpu_custom_call.1} parent=31 // pred_fallthru
          _
        %s599 = sand.u32 %s141, 1
        %s600 = scalar_lea.sflag [#allocation5], %s599
        %s601 = sand.u32 %s141, 1
        %s602 = smul.addr %s601, 32
        %s603 = scalar_lea.vmem [#allocation9], %s602
        %s604 = sand.u32 %s171, 1
        %s605 = scalar_lea.sflag [#allocation11], %s604
        %s606 = sand.u32 %s171, 1
        %s607 = smul.addr %s606, 32
        %s608 = scalar_lea.vmem [#allocation10], %s607
        // Predicated region
        $region53: #{tpu_custom_call.1} parent=31 // pred_check
          %p609 = pneg %p151
        $region54: #{tpu_custom_call.1} parent=31 // pred_check_branch
          %611 = sbr.rel (%p609) target = $region56
        $region55: #{tpu_custom_call.1} parent=31 // pred_region
          %s612 = smul.u32 4, %s33
          %614 = vsyncadd %s600, 0
          %s615 = sadd.s32 %s34, %s612
          %s616 = smul.addr %s615, 8
          %s617 = scalar_lea.hbm %s3, %s616
          %s618 = sshll.u32 %s603, 4
          %s619 = int_to_ptr.vmem [resolvable:$true] %s618
          %s620 = sshll.u32 %s617, 4
          %s621 = int_to_ptr.hbm [resolvable:$true] %s620
          %626 = dma.vmem_to_hbm [thread:$0]  %s619, 512, %s621, %s600, 128, 128, 8
        $region56: #{tpu_custom_call.1} parent=31 // pred_fallthru
          _
        // Predicated region
        $region57: #{tpu_custom_call.1} parent=31 // pred_check
          %p627 = pneg %p181
        $region58: #{tpu_custom_call.1} parent=31 // pred_check_branch
          %629 = sbr.rel (%p627) target = $region60
        $region59: #{tpu_custom_call.1} parent=31 // pred_region
          %s630 = smul.u32 4, %s33
          %632 = vsyncadd %s605, 0
          %s633 = sadd.s32 %s35, %s34
          %s634 = sadd.s32 %s633, %s630
          %s635 = smul.addr %s634, 8
          %s636 = scalar_lea.hbm %s4, %s635
          %s637 = sshll.u32 %s608, 4
          %s638 = int_to_ptr.vmem [resolvable:$true] %s637
          %s639 = sshll.u32 %s636, 4
          %s640 = int_to_ptr.hbm [resolvable:$true] %s639
          %645 = dma.vmem_to_hbm [thread:$0]  %s638, 512, %s640, %s605, 128, 128, 8
        $region60: #{tpu_custom_call.1} parent=31 // pred_fallthru
          _
      $region32: #{tpu_custom_call.1} parent=5 // pred_fallthru
        _
      %p646 = scmp.le.s32.totalorder 2, %s23
      // Predicated region
      $region61: #{tpu_custom_call.1} parent=5 // pred_check
        %p647 = pneg %p646
      $region62: #{tpu_custom_call.1} parent=5 // pred_check_branch
        %649 = sbr.rel (%p647) target = $region64
      $region63: #{tpu_custom_call.1} parent=5 // pred_region
        %s650 = ssub.s32 %s23, 2
        // Predicated region
        $region65: #{tpu_custom_call.1} parent=63 // pred_check
          %p651 = pneg %p157
        $region66: #{tpu_custom_call.1} parent=63 // pred_check_branch
          %653 = sbr.rel (%p651) target = $region68
        $region67: #{tpu_custom_call.1} parent=63 // pred_region
          %s654 = sand.u32 %s142, 1
          %s655 = scalar_lea.sflag [#allocation5], %s654
          %s656 = sand.u32 %s142, 1
          %s657 = smul.addr %s656, 32
          %s658 = scalar_lea.vmem [#allocation9], %s657
          %660 = dma.done %s655, 512
        $region68: #{tpu_custom_call.1} parent=63 // pred_fallthru
          _
        // Predicated region
        $region69: #{tpu_custom_call.1} parent=63 // pred_check
          %p661 = pneg %p187
        $region70: #{tpu_custom_call.1} parent=63 // pred_check_branch
          %663 = sbr.rel (%p661) target = $region72
        $region71: #{tpu_custom_call.1} parent=63 // pred_region
          %s664 = sand.u32 %s172, 1
          %s665 = scalar_lea.sflag [#allocation11], %s664
          %s666 = sand.u32 %s172, 1
          %s667 = smul.addr %s666, 32
          %s668 = scalar_lea.vmem [#allocation10], %s667
          %670 = dma.done %s665, 512
        $region72: #{tpu_custom_call.1} parent=63 // pred_fallthru
          _
      $region64: #{tpu_custom_call.1} parent=5 // pred_fallthru
        _
    $region6: #{tpu_custom_call.1} parent=1 // loop_footer
      %s27 = sadd.s32 1, %s23
    $region7: #{tpu_custom_call.1} parent=1 // loop_footer_branch
      %22 = sbr.rel target = $region3
    $region8: #{tpu_custom_call.1} parent=1 // loop_exit
      _
    %671 = vsyncpa [#allocation4], 1
    %s672 = scalar_lea.sflag [#allocation4], 1
    %673 = vsyncpa %s672, 1
    %674 = vsyncpa [#allocation7], 1
    %s675 = scalar_lea.sflag [#allocation7], 1
    %676 = vsyncpa %s675, 1
    %677 = vsyncpa [#allocation5], 1
    %s678 = scalar_lea.sflag [#allocation5], 1
    %679 = vsyncpa %s678, 1
    %680 = vsyncpa [#allocation11], 1
    %s681 = scalar_lea.sflag [#allocation11], 1
    %682 = vsyncpa %s681, 1

</llo_original>
